<compile_context>
chip_gen: v7x
topology: tpu7x:2x2x1
jax: 0.10.0
libtpu: 0.0.40
codegen_flags: <defaults>
</compile_context>

<pallas_src>
import functools

import jax
import jax.numpy as jnp
from jax.experimental import pallas as pl
from jax.experimental.pallas import tpu as pltpu

LANE = 128


def _round_up(x, m):
    return (x + m - 1) // m * m


def _pick_tile(n, preferred, min_blocks=1):
    """Largest tile from `preferred` that divides n (optionally with >= min_blocks)."""
    for c in preferred:
        if c <= n and n % c == 0 and n // c >= min_blocks:
            return c
    for c in preferred:
        if c <= n and n % c == 0:
            return c
    return n


# --------------------------------------------------------------------------
# Kernels
# --------------------------------------------------------------------------

def _project_kernel(x_ref, wl_ref, p_ref):
    """Row-tiled neighbor projection: P = X @ Wl (bf16 out)."""
    p_ref[...] = jnp.dot(x_ref[...], wl_ref[...],
                         preferred_element_type=jnp.float32).astype(p_ref.dtype)


def _agg1_kernel(a_ref, p_ref, x_ref, wr1_ref, b1_ref, w2cat_ref, b2_ref,
                 p2_ref, s2_ref, acc_ref):
    """Layer-1 aggregation fused with the layer-2 projection.

    init (k==0):   acc = X_tile @ Wr1 + b1          (self/root term, seeds accumulator)
    body:          acc += A_tile @ P1_tile           (f32 accumulation on the MXU)
    finalize:      h1 = relu(acc); [p2 | s2'] = h1 @ [Wl2 | Wr2]  (one 256-wide pass)
                   p2 -> bf16, s2 = s2' + b2 -> f32   (h1 never written to HBM)
    """
    k = pl.program_id(1)

    @pl.when(k == 0)
    def _init():
        acc_ref[...] = (jnp.dot(x_ref[...], wr1_ref[...],
                                preferred_element_type=jnp.float32)
                        + b1_ref[...])

    acc_ref[...] += jnp.dot(a_ref[...], p_ref[...],
                            preferred_element_type=jnp.float32)

    @pl.when(k == pl.num_programs(1) - 1)
    def _finalize():
        h1 = jnp.maximum(acc_ref[...], 0.0).astype(jnp.bfloat16)
        hp = p2_ref.shape[-1]
        pq = jnp.dot(h1, w2cat_ref[...], preferred_element_type=jnp.float32)
        p2_ref[...] = pq[:, :hp].astype(p2_ref.dtype)
        s2_ref[...] = pq[:, hp:] + b2_ref[...]


def _agg2_head_kernel(a_ref, p_ref, s_ref, w3_ref, b3_ref, emb_ref, acc_ref,
                      *, score_col):
    """Layer-2 aggregation fused with the fc3 head.

    score = relu(acc) @ w3 + b3 is a VPU multiply + lane reduction; it is packed into
    the (otherwise zero) padding column `score_col` of the lane-dense emb output.
    """
    k = pl.program_id(1)

    @pl.when(k == 0)
    def _init():
        acc_ref[...] = s_ref[...]

    acc_ref[...] += jnp.dot(a_ref[...], p_ref[...],
                            preferred_element_type=jnp.float32)

    @pl.when(k == pl.num_programs(1) - 1)
    def _finalize():
        h2 = jnp.maximum(acc_ref[...], 0.0)
        sc = jnp.sum(h2 * w3_ref[...], axis=-1, keepdims=True) + b3_ref[...]
        cols = jax.lax.broadcasted_iota(jnp.int32, h2.shape, 1)
        emb_ref[...] = jnp.where(cols == score_col, sc, h2).astype(emb_ref.dtype)


# --------------------------------------------------------------------------
# pallas_call wrappers
# --------------------------------------------------------------------------

def _projection(x, wl):
    n, f = x.shape
    hp = wl.shape[1]
    tm = _pick_tile(n, (512, 256, 128))
    return pl.pallas_call(
        _project_kernel,
        out_shape=jax.ShapeDtypeStruct((n, hp), jnp.bfloat16),
        grid_spec=pltpu.PrefetchScalarGridSpec(
            num_scalar_prefetch=0,
            grid=(n // tm,),
            in_specs=[pl.BlockSpec((tm, f), lambda i: (i, 0)),
                      pl.BlockSpec((f, hp), lambda i: (0, 0))],
            out_specs=pl.BlockSpec((tm, hp), lambda i: (i, 0)),
        ),
        compiler_params=pltpu.CompilerParams(dimension_semantics=("parallel",)),
    )(x, wl)


def _agg_tiles(n):
    # Larger tiles amortize per-grid-step overhead on the HBM-bound A stream.
    # tm capped at 512 (keeps >= 2 row blocks for megacore when possible),
    # tk capped at 2048 (safe on v7x's smaller VMEM as well as v5e/v6e).
    tm = _pick_tile(n, (512, 256, 128), min_blocks=2)
    tk = _pick_tile(n, (2048, 1024, 512, 256, 128))
    return tm, tk


def _agg_cost(adj, p, n_row_tiles, extra_bytes):
    # A streamed once; P re-read once per row tile.
    return pl.CostEstimate(
        flops=2 * adj.shape[0] * adj.shape[1] * p.shape[1],
        transcendentals=0,
        bytes_accessed=int(adj.size * adj.dtype.itemsize
                           + p.size * p.dtype.itemsize * n_row_tiles
                           + extra_bytes),
    )


def _aggregate1(adj, p1, x, wr1, b1, w2cat, b2):
    n = adj.shape[0]
    hp = p1.shape[1]
    f = x.shape[1]
    tm, tk = _agg_tiles(n)
    grid = (n // tm, n // tk)
    extra = (x.size * x.dtype.itemsize
             + wr1.size * wr1.dtype.itemsize
             + w2cat.size * w2cat.dtype.itemsize
             + n * hp * (2 + 4))   # p2 bf16 + s2 f32 writes
    return pl.pallas_call(
        _agg1_kernel,
        out_shape=(jax.ShapeDtypeStruct((n, hp), jnp.bfloat16),   # P2 = h1 @ Wl2
                   jax.ShapeDtypeStruct((n, hp), jnp.float32)),   # S2 = h1 @ Wr2 + b2
        grid_spec=pltpu.PrefetchScalarGridSpec(
            num_scalar_prefetch=0,
            grid=grid,
            in_specs=[pl.BlockSpec((tm, tk), lambda i, k: (i, k)),      # A
                      pl.BlockSpec((tk, hp), lambda i, k: (k, 0)),      # P1
                      pl.BlockSpec((tm, f), lambda i, k: (i, 0)),       # X row tile
                      pl.BlockSpec((f, hp), lambda i, k: (0, 0)),       # Wr1
                      pl.BlockSpec((1, hp), lambda i, k: (0, 0)),       # b1
                      pl.BlockSpec((hp, 2 * hp), lambda i, k: (0, 0)),  # [Wl2 | Wr2]
                      pl.BlockSpec((1, hp), lambda i, k: (0, 0))],      # b2
            out_specs=(pl.BlockSpec((tm, hp), lambda i, k: (i, 0)),
                       pl.BlockSpec((tm, hp), lambda i, k: (i, 0))),
            scratch_shapes=[pltpu.VMEM((tm, hp), jnp.float32)],
        ),
        compiler_params=pltpu.CompilerParams(
            dimension_semantics=("parallel", "arbitrary")),
        cost_estimate=_agg_cost(adj, p1, n // tm, extra),
    )(adj, p1, x, wr1, b1, w2cat, b2)


def _aggregate2_head(adj, p2, s2, w3row, b3, *, score_col):
    n = adj.shape[0]
    hp = p2.shape[1]
    tm, tk = _agg_tiles(n)
    grid = (n // tm, n // tk)
    extra = s2.size * s2.dtype.itemsize + n * hp * 4   # s2 reads + emb f32 write
    kern = functools.partial(_agg2_head_kernel, score_col=score_col)
    return pl.pallas_call(
        kern,
        out_shape=jax.ShapeDtypeStruct((n, hp), jnp.float32),    # emb (+ packed score)
        grid_spec=pltpu.PrefetchScalarGridSpec(
            num_scalar_prefetch=0,
            grid=grid,
            in_specs=[pl.BlockSpec((tm, tk), lambda i, k: (i, k)),   # A
                      pl.BlockSpec((tk, hp), lambda i, k: (k, 0)),   # P2
                      pl.BlockSpec((tm, hp), lambda i, k: (i, 0)),   # S2
                      pl.BlockSpec((1, hp), lambda i, k: (0, 0)),    # w3 (row)
                      pl.BlockSpec((1, 1), lambda i, k: (0, 0))],    # b3
            out_specs=pl.BlockSpec((tm, hp), lambda i, k: (i, 0)),
            scratch_shapes=[pltpu.VMEM((tm, hp), jnp.float32)],
        ),
        compiler_params=pltpu.CompilerParams(
            dimension_semantics=("parallel", "arbitrary")),
        cost_estimate=_agg_cost(adj, p2, n // tm, extra),
    )(adj, p2, s2, w3row, b3)


# --------------------------------------------------------------------------
# Model glue
# --------------------------------------------------------------------------

def build_mean_adjacency(edge_index, num_nodes, padded_nodes=None):
    """Dense row-normalized adjacency A[i, j] = 1/deg_in(i) per edge j->i.

    Depends only on edge_index; cache/reuse it across forward calls."""
    npad = padded_nodes if padded_nodes is not None else _round_up(
        max(num_nodes, LANE), LANE)
    src, dst = edge_index[0], edge_index[1]
    a = jnp.zeros((npad, npad), jnp.float32).at[dst, src].add(1.0)
    deg = jnp.sum(a, axis=1, keepdims=True)
    a = a / jnp.maximum(deg, 1.0)
    return a.astype(jnp.bfloat16)


def sage_forward(x, edge_index, params, adj=None):
    """x: (N, nfeat) f32; edge_index: (2, E) int32 rows [src, dst]."""
    n, nfeat = x.shape
    hdim = params["wl2"].shape[1]
    npad = _round_up(max(n, LANE), LANE)
    fpad = _round_up(max(nfeat, LANE), LANE)
    hp = _round_up(max(hdim, LANE), LANE)
    if hdim == hp:
        # Keep one spare zero lane to carry the packed fc3 score.
        # TODO(synk): when hdim is an exact multiple of 128, a dedicated narrow score
        # output would avoid this extra padded lane block.
        hp += LANE
    score_col = hdim

    if adj is None:
        adj = build_mean_adjacency(edge_index, n, npad)

    def pad2(w, r, c, dt):
        return jnp.zeros((r, c), dt).at[:w.shape[0], :w.shape[1]].set(w.astype(dt))

    xp = pad2(x, npad, fpad, jnp.bfloat16)
    wl1 = pad2(params["wl1"], fpad, hp, jnp.bfloat16)
    wr1 = pad2(params["wr1"], fpad, hp, jnp.bfloat16)
    b1 = pad2(params["b1"], 1, hp, jnp.float32)
    wl2 = pad2(params["wl2"], hp, hp, jnp.bfloat16)
    wr2 = pad2(params["wr2"], hp, hp, jnp.bfloat16)
    w2cat = jnp.concatenate([wl2, wr2], axis=1)            # (hp, 2*hp) bf16
    b2 = pad2(params["b2"], 1, hp, jnp.float32)
    w3row = pad2(params["w3"].T, 1, hp, jnp.float32)
    b3 = params["b3"].astype(jnp.float32).reshape(1, 1)

    # ---- SAGEConv 1 (+ ReLU; dropout is identity in eval mode) ----
    p1 = _projection(xp, wl1)                               # P1 = X @ Wl1  (bf16)
    # Layer-1 aggregation; the layer-2 projection is fused into its finalize.
    p2, s2 = _aggregate1(adj, p1, xp, wr1, b1, w2cat, b2)

    # ---- SAGEConv 2 (+ ReLU) fused with the fc3 head ----
    emb_pad = _aggregate2_head(adj, p2, s2, w3row, b3, score_col=score_col)

    return {"score": emb_pad[:n, score_col:score_col + 1],
            "emb": emb_pad[:n, :hdim]}


def init_params(key, nfeat, hdim):
    ks = jax.random.split(key, 7)
    s1 = 1.0 / jnp.sqrt(nfeat)
    s2 = 1.0 / jnp.sqrt(hdim)
    return {
        # SAGEConv1: lin_l (bias) and lin_r (no bias), stored (in, out)
        "wl1": jax.random.uniform(ks[0], (nfeat, hdim), jnp.float32, -s1, s1),
        "wr1": jax.random.uniform(ks[1], (nfeat, hdim), jnp.float32, -s1, s1),
        "b1":  jax.random.uniform(ks[2], (1, hdim), jnp.float32, -s1, s1),
        # SAGEConv2
        "wl2": jax.random.uniform(ks[3], (hdim, hdim), jnp.float32, -s2, s2),
        "wr2": jax.random.uniform(ks[4], (hdim, hdim), jnp.float32, -s2, s2),
        "b2":  jax.random.uniform(ks[5], (1, hdim), jnp.float32, -s2, s2),
        # fc3: Linear(hdim, 1)
        "w3":  jax.random.uniform(ks[6], (hdim, 1), jnp.float32, -s2, s2),
        "b3":  jnp.zeros((1, 1), jnp.float32),
    }


def _reference_forward(x, edge_index, params):
    """Pure-JAX f32 reference with identical SAGEConv 'mean' semantics."""
    n = x.shape[0]
    src, dst = edge_index[0], edge_index[1]
    a = jnp.zeros((n, n), jnp.float32).at[dst, src].add(1.0)
    deg = jnp.sum(a, axis=1, keepdims=True)
    a = a / jnp.maximum(deg, 1.0)
    h1 = jnp.maximum(a @ x @ params["wl1"] + params["b1"] + x @ params["wr1"], 0.0)
    h2 = jnp.maximum(a @ h1 @ params["wl2"] + params["b2"] + h1 @ params["wr2"], 0.0)
    score = h2 @ params["w3"] + params["b3"]
    return {"score": score, "emb": h2}


if __name__ == "__main__":
    key = jax.random.PRNGKey(0)
    k_x, k_e, k_p = jax.random.split(key, 3)

    # N=1024 exercises the enlarged tiles: aggregation grid (2, 1) with tm=512 /
    # tk=1024 (1 MB bf16 A tiles), both TensorCores active on the "parallel" row axis.
    N, NFEAT, HDIM, E = 1024, 96, 32, 4096
    x = jax.random.normal(k_x, (N, NFEAT), jnp.float32)
    edge_index = jax.random.randint(k_e, (2, E), 0, N, jnp.int32)
    params = init_params(k_p, NFEAT, HDIM)

    out = sage_forward(x, edge_index, params)
    out = jax.block_until_ready(out)

    assert out["score"].shape == (N, 1)
    assert out["emb"].shape == (N, HDIM)

    # Sanity check against the f32 reference (bf16 MXU inputs => loose tol).
    ref = _reference_forward(x, edge_index, params)
    scale_e = float(jnp.max(jnp.abs(ref["emb"]))) + 1e-6
    scale_s = float(jnp.max(jnp.abs(ref["score"]))) + 1e-6
    err_e = float(jnp.max(jnp.abs(out["emb"] - ref["emb"]))) / scale_e
    err_s = float(jnp.max(jnp.abs(out["score"] - ref["score"]))) / scale_s
    assert err_e < 0.1 and err_s < 0.1, (err_e, err_s)

    print("KERNEL_OK")
</pallas_src>

<mosaic_0001>
module attributes {stable_mosaic.version = 11 : i64} {
  func.func @_project_kernel(%arg0: i32, %arg1: memref<512x128xbf16, #tpu.memory_space<vmem>>, %arg2: memref<128x128xbf16, #tpu.memory_space<vmem>>, %arg3: memref<512x128xbf16, #tpu.memory_space<vmem>>) attributes {dimension_semantics = [#tpu.dimension_semantics<parallel>], iteration_bounds = array<i64: 2>, scalar_prefetch = 0 : i64, scratch_operands = 0 : i64, tpu.core_type = #tpu.core_type<tc>, window_params = [{transform_indices = @transform_0, window_bounds = array<i64: 512, 128>}, {pipeline_mode = #tpu.pipeline_mode<synchronous>, transform_indices = @transform_1, window_bounds = array<i64: 128, 128>}, {transform_indices = @transform_2, window_bounds = array<i64: 512, 128>}]} {
    %c0 = arith.constant 0 : index
    %c0_0 = arith.constant 0 : index
    %0 = vector.load %arg1[%c0, %c0_0] : memref<512x128xbf16, #tpu.memory_space<vmem>>, vector<512x128xbf16>
    %c0_1 = arith.constant 0 : index
    %c0_2 = arith.constant 0 : index
    %1 = vector.load %arg2[%c0_1, %c0_2] : memref<128x128xbf16, #tpu.memory_space<vmem>>, vector<128x128xbf16>
    %cst = arith.constant dense<0.000000e+00> : vector<512x128xf32>
    %2 = tpu.matmul %0, %1, %cst {dimension_numbers = #tpu.dot_dimension_numbers<[1], [0], [0], [1], [0, 0, 1, 1], [], []>} : vector<512x128xbf16>, vector<128x128xbf16>, vector<512x128xf32> -> vector<512x128xf32>
    %3 = arith.truncf %2 : vector<512x128xf32> to vector<512x128xbf16>
    %c0_3 = arith.constant 0 : index
    %c0_4 = arith.constant 0 : index
    %4 = vector.load %arg3[%c0_3, %c0_4] : memref<512x128xbf16, #tpu.memory_space<vmem>>, vector<512x128xbf16>
    tpu.vector_store %arg3[%c0_3, %c0_4], %3 {strides = array<i32>} : memref<512x128xbf16, #tpu.memory_space<vmem>>, vector<512x128xbf16>,
    return
  }
  func.func @transform_0(%arg0: i32) -> (i32, i32) {
    %c0_i32 = arith.constant 0 : i32
    %c0_i32_0 = arith.constant 0 : i32
    return %arg0, %c0_i32 : i32, i32
  }
  func.func @transform_1(%arg0: i32) -> (i32, i32) {
    %c0_i32 = arith.constant 0 : i32
    %c0_i32_0 = arith.constant 0 : i32
    %c0_i32_1 = arith.constant 0 : i32
    return %c0_i32, %c0_i32_0 : i32, i32
  }
  func.func @transform_2(%arg0: i32) -> (i32, i32) {
    %c0_i32 = arith.constant 0 : i32
    %c0_i32_0 = arith.constant 0 : i32
    return %arg0, %c0_i32 : i32, i32
  }
}

</mosaic_0001>

<llo_original>
// kernel: tpu_custom_call.1
$region0: #{tpu_custom_call.1}
  #allocation0 [shape = 'u32[]', space=smem, size = 0x4, offset = 0x4, fixed_abs, tag = 'smem constant byte address 0x4 - core index']
  #allocation1 [shape = 'u32[144,128]{1,0:T(1,128)}', space=vmem, size = 0x12000, scoped, tag = 'internal scratch']
  %s0 = inlined_call_operand.hbm [shape: bf16[1024,128], index: 0, kind: input, shape index: {}]
  %s1 = inlined_call_operand.hbm [shape: bf16[128,128], index: 1, kind: input, shape index: {}]
  %s2 = inlined_call_operand.hbm [shape: bf16[1024,128], index: 2, kind: output, shape index: {}]
  %s3 = sld [smem:[#allocation0]]
  $region49: #{tpu_custom_call.1} parent=0
    _
  %s5 = ssub.s32 1, %s3
  %s6 = scalar_select 0, %s5, %s3
  $region1: #{tpu_custom_call.1} parent=0
    #allocation2 [shape = 'u8[262144]{0}', space=vmem, size = 0x40000, scoped, tag = 'input window, operand 0']
    #allocation3 [shape = 's32[2]{0}', space=sflag, size = 0x8, scoped, tag = 'scoped memory for tpu_custom_call.1']
    #allocation4 [shape = 's32[2]{0}', space=sflag, size = 0x8, scoped, tag = 'scoped memory for tpu_custom_call.1']
    #allocation5 [shape = 'u8[32768]{0}', space=vmem, size = 0x8000, scoped, tag = 'input window, operand 1, single buffered']
    #allocation6 [shape = 's32[1]{0}', space=sflag, size = 0x4, scoped, tag = 'scoped memory for tpu_custom_call.1']
    #allocation7 [shape = 'u8[262144]{0}', space=vmem, size = 0x40000, scoped, tag = 'output window, operand 0']
    %7 = vsyncpa [#allocation3], 0
    %s8 = scalar_lea.sflag [#allocation3], 1
    %9 = vsyncpa %s8, 0
    %10 = vsyncpa [#allocation6], 0
    %11 = vsyncpa [#allocation4], 0
    %s12 = scalar_lea.sflag [#allocation4], 1
    %13 = vsyncpa %s12, 0
    loop: start=0, step=1, limit=4
    $region2: #{tpu_custom_call.1} parent=1 // loop_pre_header
      _
    $region3: #{tpu_custom_call.1} parent=1 // loop_header
      %s15 = sphi 0, %s19
      %p16 = scmp.ge.s32.totalorder %s15, 4
      %s25 = sphi 0, %s27
      %s28 = sphi 0, %s25
      %s29 = sphi 0, %s28
      %s45 = sphi 0, %s29
      %s49 = sphi 0, %s49
      %s51 = sphi 0, %s49
      %s52 = sphi 0, %s51
      %s66 = sphi 0, %s52
      %s72 = sphi 0, %s74
      %s75 = sphi 0, %s72
      %s76 = sphi 0, %s75
      %s92 = sphi 0, %s76
    $region4: #{tpu_custom_call.1} parent=1 // loop_header_branch
      %18 = sbr.rel (%p16) target = $region8
    $region5: #{tpu_custom_call.1} parent=1 // loop_body
      %s20 = ssub.s32 %s15, 1
      %s21 = ssub.s32 %s15, 2
      %s22 = sadd.s32 %s15, 1
      %s23 = ssub.s32 %s15, %s22
      %p24 = scmp.eq.s32.totalorder %s23, 0
      %s26 = sadd.s32 %s25, 1
      %s27 = scalar_select %p24, %s25, %s26
      %p30 = pneg %p24
      %p31 = scmp.eq.s32.totalorder %s15, 1
      %p32 = por %p30, %p31
      %p33 = scmp.ne.s32.totalorder %s25, %s28
      %p34 = scmp.eq.s32.totalorder %s15, 0
      %p35 = por %p33, %p34
      %p36 = scmp.ne.s32.totalorder %s25, %s28
      %p37 = scmp.eq.s32.totalorder %s20, 1
      %p38 = por %p36, %p37
      %p39 = scmp.ne.s32.totalorder %s28, %s29
      %p40 = scmp.eq.s32.totalorder %s20, 0
      %p41 = por %p39, %p40
      %p42 = scmp.ne.s32.totalorder %s28, %s29
      %p43 = scmp.eq.s32.totalorder %s21, 1
      %p44 = por %p42, %p43
      %p46 = scmp.ne.s32.totalorder %s29, %s45
      %p47 = scmp.eq.s32.totalorder %s21, 0
      %p48 = por %p46, %p47
      %s50 = sadd.s32 %s49, 1
      %p53 = scmp.eq.s32.totalorder %s15, 1
      %p54 = scmp.ne.s32.totalorder %s49, %s51
      %p55 = scmp.eq.s32.totalorder %s15, 0
      %p56 = por %p54, %p55
      %p57 = scmp.ne.s32.totalorder %s49, %s51
      %p58 = scmp.eq.s32.totalorder %s20, 1
      %p59 = por %p57, %p58
      %p60 = scmp.ne.s32.totalorder %s51, %s52
      %p61 = scmp.eq.s32.totalorder %s20, 0
      %p62 = por %p60, %p61
      %p63 = scmp.ne.s32.totalorder %s51, %s52
      %p64 = scmp.eq.s32.totalorder %s21, 1
      %p65 = por %p63, %p64
      %p67 = scmp.ne.s32.totalorder %s52, %s66
      %p68 = scmp.eq.s32.totalorder %s21, 0
      %p69 = por %p67, %p68
      %s70 = ssub.s32 %s15, %s22
      %p71 = scmp.eq.s32.totalorder %s70, 0
      %s73 = sadd.s32 %s72, 1
      %s74 = scalar_select %p71, %s72, %s73
      %p77 = pneg %p71
      %p78 = scmp.eq.s32.totalorder %s15, 1
      %p79 = por %p77, %p78
      %p80 = scmp.ne.s32.totalorder %s72, %s75
      %p81 = scmp.eq.s32.totalorder %s15, 0
      %p82 = por %p80, %p81
      %p83 = scmp.ne.s32.totalorder %s72, %s75
      %p84 = scmp.eq.s32.totalorder %s20, 1
      %p85 = por %p83, %p84
      %p86 = scmp.ne.s32.totalorder %s75, %s76
      %p87 = scmp.eq.s32.totalorder %s20, 0
      %p88 = por %p86, %p87
      %p89 = scmp.ne.s32.totalorder %s75, %s76
      %p90 = scmp.eq.s32.totalorder %s21, 1
      %p91 = por %p89, %p90
      %p93 = scmp.ne.s32.totalorder %s76, %s92
      %p94 = scmp.eq.s32.totalorder %s21, 0
      %p95 = por %p93, %p94
      %p96 = scmp.le.s32.totalorder 1, %s15
      %p97 = scmp.lt.s32.totalorder %s15, 3
      %p98 = pnand %p96, %p97
      %p99 = pneg %p98
      // Predicated region
      $region9: #{tpu_custom_call.1} parent=5 // pred_check
        _
      $region10: #{tpu_custom_call.1} parent=5 // pred_check_branch
        %101 = sbr.rel (%p98) target = $region12
      $region11: #{tpu_custom_call.1} parent=5 // pred_region
        %s102 = ssub.s32 %s15, 1
        // Predicated region
        $region13: #{tpu_custom_call.1} parent=11 // pred_check
          %p103 = pneg %p62
        $region14: #{tpu_custom_call.1} parent=11 // pred_check_branch
          %105 = sbr.rel (%p103) target = $region16
        $region15: #{tpu_custom_call.1} parent=11 // pred_region
          %s107 = ssub.s32 1024, 1024
          %108 = vsyncadd [#allocation6], %s107
          %s109 = sshll.u32 [#allocation5], 4
          %s110 = int_to_ptr.vmem [resolvable:$true] %s109
          %115 = dma.hbm_to_vmem [thread:$0]  %s1, 1024, %s110, [#allocation6], 64, 64, 4
        $region16: #{tpu_custom_call.1} parent=11 // pred_fallthru
          _
      $region12: #{tpu_custom_call.1} parent=5 // pred_fallthru
        _
      %p116 = scmp.lt.s32.totalorder %s15, 2
      // Predicated region
      $region17: #{tpu_custom_call.1} parent=5 // pred_check
        %p117 = pneg %p116
      $region18: #{tpu_custom_call.1} parent=5 // pred_check_branch
        %119 = sbr.rel (%p117) target = $region20
      $region19: #{tpu_custom_call.1} parent=5 // pred_region
        // Predicated region
        $region21: #{tpu_custom_call.1} parent=19 // pred_check
          %p120 = pneg %p35
        $region22: #{tpu_custom_call.1} parent=19 // pred_check_branch
          %122 = sbr.rel (%p120) target = $region24
        $region23: #{tpu_custom_call.1} parent=19 // pred_region
          %s123 = sand.u32 %s25, 1
          %s124 = scalar_lea.sflag [#allocation3], %s123
          %s125 = sand.u32 %s25, 1
          %s126 = smul.addr %s125, 256
          %s127 = scalar_lea.vmem [#allocation2], %s126
          %s128 = smul.u32 64, %s15
          %s130 = ssub.s32 4096, 4096
          %131 = vsyncadd %s124, %s130
          %s132 = smul.addr %s128, 64
          %s133 = scalar_lea.hbm %s0, %s132
          %s134 = sshll.u32 %s127, 4
          %s135 = int_to_ptr.vmem [resolvable:$true] %s134
          %140 = dma.hbm_to_vmem [thread:$0]  %s133, 4096, %s135, %s124, 64, 64, 4
        $region24: #{tpu_custom_call.1} parent=19 // pred_fallthru
          _
      $region20: #{tpu_custom_call.1} parent=5 // pred_fallthru
        _
      %p141 = scmp.le.s32.totalorder 1, %s15
      %p142 = scmp.lt.s32.totalorder %s15, 3
      %p143 = pnand %p141, %p142
      %p144 = pneg %p143
      // Predicated region
      $region25: #{tpu_custom_call.1} parent=5 // pred_check
        _
      $region26: #{tpu_custom_call.1} parent=5 // pred_check_branch
        %146 = sbr.rel (%p143) target = $region28
      $region27: #{tpu_custom_call.1} parent=5 // pred_region
        %s147 = ssub.s32 %s15, 1
        %s148 = sand.u32 %s28, 1
        %s149 = scalar_lea.sflag [#allocation3], %s148
        %s150 = sand.u32 %s28, 1
        %s151 = smul.addr %s150, 256
        %s152 = scalar_lea.vmem [#allocation2], %s151
        // Predicated region
        $region29: #{tpu_custom_call.1} parent=27 // pred_check
          %p153 = pneg %p41
        $region30: #{tpu_custom_call.1} parent=27 // pred_check_branch
          %155 = sbr.rel (%p153) target = $region32
        $region31: #{tpu_custom_call.1} parent=27 // pred_region
          %156 = dma.done %s149, 4096
        $region32: #{tpu_custom_call.1} parent=27 // pred_fallthru
          _
        // Predicated region
        $region33: #{tpu_custom_call.1} parent=27 // pred_check
          %p157 = pneg %p62
        $region34: #{tpu_custom_call.1} parent=27 // pred_check_branch
          %159 = sbr.rel (%p157) target = $region36
        $region35: #{tpu_custom_call.1} parent=27 // pred_region
          %160 = dma.done [#allocation6], 1024
        $region36: #{tpu_custom_call.1} parent=27 // pred_fallthru
          _
        %s161 = sand.u32 %s28, 1
        %s162 = scalar_lea.sflag [#allocation3], %s161
        %s163 = sand.u32 %s28, 1
        %s164 = smul.addr %s163, 256
        %s165 = scalar_lea.vmem [#allocation2], %s164
        %p166 = pneg %p41
        %p167 = pneg %p38
        %p168 = pneg %p62
        %p169 = pneg %p59
        %p170 = pneg %p88
        %p171 = pneg %p85
        %s172 = sand.u32 %s75, 1
        %s173 = scalar_lea.sflag [#allocation4], %s172
        %s174 = sand.u32 %s75, 1
        %s175 = smul.addr %s174, 256
        %s176 = scalar_lea.vmem [#allocation7], %s175
        %s177 = smul.u32 64, %s20
        %s178 = smul.u32 64, %s20
        %v180 = vld [vmem:[%s152] sm:$0xf]
        %v181 = vld [vmem:[%s152 + $0x4] sm:$0xf]
        %v182 = vld [vmem:[%s152 + $0x8] sm:$0xf]
        %v183 = vld [vmem:[%s152 + $0xc] sm:$0xf]
        %v184 = vld [vmem:[%s152 + $0x10] sm:$0xf]
        %v185 = vld [vmem:[%s152 + $0x14] sm:$0xf]
        %v186 = vld [vmem:[%s152 + $0x18] sm:$0xf]
        %v187 = vld [vmem:[%s152 + $0x1c] sm:$0xf]
        %v188 = vld [vmem:[%s152 + $0x20] sm:$0xf]
        %v189 = vld [vmem:[%s152 + $0x24] sm:$0xf]
        %v190 = vld [vmem:[%s152 + $0x28] sm:$0xf]
        %v191 = vld [vmem:[%s152 + $0x2c] sm:$0xf]
        %v192 = vld [vmem:[%s152 + $0x30] sm:$0xf]
        %v193 = vld [vmem:[%s152 + $0x34] sm:$0xf]
        %v194 = vld [vmem:[%s152 + $0x38] sm:$0xf]
        %v195 = vld [vmem:[%s152 + $0x3c] sm:$0xf]
        %v196 = vld [vmem:[%s152 + $0x40] sm:$0xf]
        %v197 = vld [vmem:[%s152 + $0x44] sm:$0xf]
        %v198 = vld [vmem:[%s152 + $0x48] sm:$0xf]
        %v199 = vld [vmem:[%s152 + $0x4c] sm:$0xf]
        %v200 = vld [vmem:[%s152 + $0x50] sm:$0xf]
        %v201 = vld [vmem:[%s152 + $0x54] sm:$0xf]
        %v202 = vld [vmem:[%s152 + $0x58] sm:$0xf]
        %v203 = vld [vmem:[%s152 + $0x5c] sm:$0xf]
        %v204 = vld [vmem:[%s152 + $0x60] sm:$0xf]
        %v205 = vld [vmem:[%s152 + $0x64] sm:$0xf]
        %v206 = vld [vmem:[%s152 + $0x68] sm:$0xf]
        %v207 = vld [vmem:[%s152 + $0x6c] sm:$0xf]
        %v208 = vld [vmem:[%s152 + $0x70] sm:$0xf]
        %v209 = vld [vmem:[%s152 + $0x74] sm:$0xf]
        %v210 = vld [vmem:[%s152 + $0x78] sm:$0xf]
        %v211 = vld [vmem:[%s152 + $0x7c] sm:$0xf]
        %v212 = vld [vmem:[%s152 + $0x80] sm:$0xf]
        %v213 = vld [vmem:[%s152 + $0x84] sm:$0xf]
        %v214 = vld [vmem:[%s152 + $0x88] sm:$0xf]
        %v215 = vld [vmem:[%s152 + $0x8c] sm:$0xf]
        %v216 = vld [vmem:[%s152 + $0x90] sm:$0xf]
        %v217 = vld [vmem:[%s152 + $0x94] sm:$0xf]
        %v218 = vld [vmem:[%s152 + $0x98] sm:$0xf]
        %v219 = vld [vmem:[%s152 + $0x9c] sm:$0xf]
        %v220 = vld [vmem:[%s152 + $0xa0] sm:$0xf]
        %v221 = vld [vmem:[%s152 + $0xa4] sm:$0xf]
        %v222 = vld [vmem:[%s152 + $0xa8] sm:$0xf]
        %v223 = vld [vmem:[%s152 + $0xac] sm:$0xf]
        %v224 = vld [vmem:[%s152 + $0xb0] sm:$0xf]
        %v225 = vld [vmem:[%s152 + $0xb4] sm:$0xf]
        %v226 = vld [vmem:[%s152 + $0xb8] sm:$0xf]
        %v227 = vld [vmem:[%s152 + $0xbc] sm:$0xf]
        %v228 = vld [vmem:[%s152 + $0xc0] sm:$0xf]
        %v229 = vld [vmem:[%s152 + $0xc4] sm:$0xf]
        %v230 = vld [vmem:[%s152 + $0xc8] sm:$0xf]
        %v231 = vld [vmem:[%s152 + $0xcc] sm:$0xf]
        %v232 = vld [vmem:[%s152 + $0xd0] sm:$0xf]
        %v233 = vld [vmem:[%s152 + $0xd4] sm:$0xf]
        %v234 = vld [vmem:[%s152 + $0xd8] sm:$0xf]
        %v235 = vld [vmem:[%s152 + $0xdc] sm:$0xf]
        %v236 = vld [vmem:[%s152 + $0xe0] sm:$0xf]
        %v237 = vld [vmem:[%s152 + $0xe4] sm:$0xf]
        %v238 = vld [vmem:[%s152 + $0xe8] sm:$0xf]
        %v239 = vld [vmem:[%s152 + $0xec] sm:$0xf]
        %v240 = vld [vmem:[%s152 + $0xf0] sm:$0xf]
        %v241 = vld [vmem:[%s152 + $0xf4] sm:$0xf]
        %v242 = vld [vmem:[%s152 + $0xf8] sm:$0xf]
        %v243 = vld [vmem:[%s152 + $0xfc] sm:$0xf]
        %v244 = vld [vmem:[#allocation5] sm:$0xf]
        %v245 = vld [vmem:[#allocation5 + $0x4] sm:$0xf]
        %v246 = vld [vmem:[#allocation5 + $0x8] sm:$0xf]
        %v247 = vld [vmem:[#allocation5 + $0xc] sm:$0xf]
        %v248 = vld [vmem:[#allocation5 + $0x10] sm:$0xf]
        %v249 = vld [vmem:[#allocation5 + $0x14] sm:$0xf]
        %v250 = vld [vmem:[#allocation5 + $0x18] sm:$0xf]
        %v251 = vld [vmem:[#allocation5 + $0x1c] sm:$0xf]
        %v252 = vld [vmem:[#allocation5 + $0x20] sm:$0xf]
        %v253 = vld [vmem:[#allocation5 + $0x24] sm:$0xf]
        %v254 = vld [vmem:[#allocation5 + $0x28] sm:$0xf]
        %v255 = vld [vmem:[#allocation5 + $0x2c] sm:$0xf]
        %v256 = vld [vmem:[#allocation5 + $0x30] sm:$0xf]
        %v257 = vld [vmem:[#allocation5 + $0x34] sm:$0xf]
        %v258 = vld [vmem:[#allocation5 + $0x38] sm:$0xf]
        %v259 = vld [vmem:[#allocation5 + $0x3c] sm:$0xf]
        %v324 = vunpack.c.l.b16 %v180
        %v325 = vunpack.c.l.b16 %v181
        %v326 = vunpack.c.l.b16 %v182
        %v327 = vunpack.c.l.b16 %v183
        %v328 = vunpack.c.l.b16 %v184
        %v329 = vunpack.c.l.b16 %v185
        %v330 = vunpack.c.l.b16 %v186
        %v331 = vunpack.c.l.b16 %v187
        %v332 = vunpack.c.l.b16 %v188
        %v333 = vunpack.c.l.b16 %v189
        %v334 = vunpack.c.l.b16 %v190
        %v335 = vunpack.c.l.b16 %v191
        %v336 = vunpack.c.l.b16 %v192
        %v337 = vunpack.c.l.b16 %v193
        %v338 = vunpack.c.l.b16 %v194
        %v339 = vunpack.c.l.b16 %v195
        %v340 = vunpack.c.l.b16 %v196
        %v341 = vunpack.c.l.b16 %v197
        %v342 = vunpack.c.l.b16 %v198
        %v343 = vunpack.c.l.b16 %v199
        %v344 = vunpack.c.l.b16 %v200
        %v345 = vunpack.c.l.b16 %v201
        %v346 = vunpack.c.l.b16 %v202
        %v347 = vunpack.c.l.b16 %v203
        %v348 = vunpack.c.l.b16 %v204
        %v349 = vunpack.c.l.b16 %v205
        %v350 = vunpack.c.l.b16 %v206
        %v351 = vunpack.c.l.b16 %v207
        %v352 = vunpack.c.l.b16 %v208
        %v353 = vunpack.c.l.b16 %v209
        %v354 = vunpack.c.l.b16 %v210
        %v355 = vunpack.c.l.b16 %v211
        %v356 = vunpack.c.l.b16 %v212
        %v357 = vunpack.c.l.b16 %v213
        %v358 = vunpack.c.l.b16 %v214
        %v359 = vunpack.c.l.b16 %v215
        %v360 = vunpack.c.l.b16 %v216
        %v361 = vunpack.c.l.b16 %v217
        %v362 = vunpack.c.l.b16 %v218
        %v363 = vunpack.c.l.b16 %v219
        %v364 = vunpack.c.l.b16 %v220
        %v365 = vunpack.c.l.b16 %v221
        %v366 = vunpack.c.l.b16 %v222
        %v367 = vunpack.c.l.b16 %v223
        %v368 = vunpack.c.l.b16 %v224
        %v369 = vunpack.c.l.b16 %v225
        %v370 = vunpack.c.l.b16 %v226
        %v371 = vunpack.c.l.b16 %v227
        %v372 = vunpack.c.l.b16 %v228
        %v373 = vunpack.c.l.b16 %v229
        %v374 = vunpack.c.l.b16 %v230
        %v375 = vunpack.c.l.b16 %v231
        %v376 = vunpack.c.l.b16 %v232
        %v377 = vunpack.c.l.b16 %v233
        %v378 = vunpack.c.l.b16 %v234
        %v379 = vunpack.c.l.b16 %v235
        %v380 = vunpack.c.l.b16 %v236
        %v381 = vunpack.c.l.b16 %v237
        %v382 = vunpack.c.l.b16 %v238
        %v383 = vunpack.c.l.b16 %v239
        %v384 = vunpack.c.l.b16 %v240
        %v385 = vunpack.c.l.b16 %v241
        %v386 = vunpack.c.l.b16 %v242
        %v387 = vunpack.c.l.b16 %v243
        %v388 = vpack.c.b16 %v325, %v324
        %v389 = vpack.c.b16 %v327, %v326
        %v390 = vpack.c.b16 %v329, %v328
        %v391 = vpack.c.b16 %v331, %v330
        %v392 = vpack.c.b16 %v333, %v332
        %v393 = vpack.c.b16 %v335, %v334
        %v394 = vpack.c.b16 %v337, %v336
        %v395 = vpack.c.b16 %v339, %v338
        %v396 = vpack.c.b16 %v341, %v340
        %v397 = vpack.c.b16 %v343, %v342
        %v398 = vpack.c.b16 %v345, %v344
        %v399 = vpack.c.b16 %v347, %v346
        %v400 = vpack.c.b16 %v349, %v348
        %v401 = vpack.c.b16 %v351, %v350
        %v402 = vpack.c.b16 %v353, %v352
        %v403 = vpack.c.b16 %v355, %v354
        %v404 = vpack.c.b16 %v357, %v356
        %v405 = vpack.c.b16 %v359, %v358
        %v406 = vpack.c.b16 %v361, %v360
        %v407 = vpack.c.b16 %v363, %v362
        %v408 = vpack.c.b16 %v365, %v364
        %v409 = vpack.c.b16 %v367, %v366
        %v410 = vpack.c.b16 %v369, %v368
        %v411 = vpack.c.b16 %v371, %v370
        %v412 = vpack.c.b16 %v373, %v372
        %v413 = vpack.c.b16 %v375, %v374
        %v414 = vpack.c.b16 %v377, %v376
        %v415 = vpack.c.b16 %v379, %v378
        %v416 = vpack.c.b16 %v381, %v380
        %v417 = vpack.c.b16 %v383, %v382
        %v418 = vpack.c.b16 %v385, %v384
        %v419 = vpack.c.b16 %v387, %v386
        %v468 = vunpack.c.l.b16 %v244
        %v469 = vunpack.c.l.b16 %v245
        %v470 = vunpack.c.l.b16 %v246
        %v471 = vunpack.c.l.b16 %v247
        %v472 = vunpack.c.l.b16 %v248
        %v473 = vunpack.c.l.b16 %v249
        %v474 = vunpack.c.l.b16 %v250
        %v475 = vunpack.c.l.b16 %v251
        %v476 = vunpack.c.l.b16 %v252
        %v477 = vunpack.c.l.b16 %v253
        %v478 = vunpack.c.l.b16 %v254
        %v479 = vunpack.c.l.b16 %v255
        %v480 = vunpack.c.l.b16 %v256
        %v481 = vunpack.c.l.b16 %v257
        %v482 = vunpack.c.l.b16 %v258
        %v483 = vunpack.c.l.b16 %v259
        %v484 = vpack.c.b16 %v469, %v468
        %v485 = vpack.c.b16 %v471, %v470
        %v486 = vpack.c.b16 %v473, %v472
        %v487 = vpack.c.b16 %v475, %v474
        %v488 = vpack.c.b16 %v477, %v476
        %v489 = vpack.c.b16 %v479, %v478
        %v490 = vpack.c.b16 %v481, %v480
        %v491 = vpack.c.b16 %v483, %v482
        %500 = vmatprep.subr.bf16.mxu0 0
        %501 = vmatpush1.bf16.msra.mxu0 %v484
        %502 = vmatprep.subr.bf16.mxu0 0
        %503 = vmatpush1.bf16.msra.mxu0 %v485
        %504 = vmatprep.subr.bf16.mxu0 0
        %505 = vmatpush1.bf16.msra.mxu0 %v486
        %506 = vmatprep.subr.bf16.mxu0 0
        %507 = vmatpush1.bf16.msra.mxu0 %v487
        %508 = vmatprep.subr.bf16.mxu0 0
        %509 = vmatpush1.bf16.msra.mxu0 %v488
        %510 = vmatprep.subr.bf16.mxu0 0
        %511 = vmatpush1.bf16.msra.mxu0 %v489
        %512 = vmatprep.subr.bf16.mxu0 0
        %513 = vmatpush1.bf16.msra.mxu0 %v490
        %514 = vmatprep.subr.bf16.mxu0 0
        %515 = vmatpush1.bf16.msra.mxu0 %v491
        %516 = vmatprep.subr.bf16.mxu0 0
        %517 = vmatpush1.bf16.msra.mxu0 0
        %518 = vmatprep.subr.bf16.mxu0 0
        %519 = vmatpush1.bf16.msra.mxu0 0
        %520 = vmatprep.subr.bf16.mxu0 0
        %521 = vmatpush1.bf16.msra.mxu0 0
        %522 = vmatprep.subr.bf16.mxu0 0
        %523 = vmatpush1.bf16.msra.mxu0 0
        %524 = vmatprep.subr.bf16.mxu0 0
        %525 = vmatpush1.bf16.msra.mxu0 0
        %526 = vmatprep.subr.bf16.mxu0 0
        %527 = vmatpush1.bf16.msra.mxu0 0
        %528 = vmatprep.subr.bf16.mxu0 0
        %529 = vmatpush1.bf16.msra.mxu0 0
        %530 = vmatprep.subr.bf16.mxu0 0
        %531 = vmatpush1.bf16.msra.mxu0 0
        %532 = vmatprep.mubr.bf16.mxu0 0
        %533 = vmatmul.mubr.bf16.gmra.mrb[0].mxu0 %v388
        %v534 = vpop.f32.mrb[0].mxu0
        %v535 = vadd.f32 0.0, %v534
        %v536 = vpop.f32.mrb[0].mxu0
        %v537 = vpop.f32.mrb[0].mxu0
        %v538 = vadd.f32 0.0, %v537
        %v539 = vpop.f32.mrb[0].mxu0
        %540 = vmatprep.mubr.bf16.mxu0 0
        %541 = vmatmul.mubr.bf16.gmra.mrb[0].mxu0 %v389
        %v542 = vpop.f32.mrb[0].mxu0
        %v543 = vadd.f32 0.0, %v542
        %v544 = vpop.f32.mrb[0].mxu0
        %v545 = vpop.f32.mrb[0].mxu0
        %v546 = vadd.f32 0.0, %v545
        %v547 = vpop.f32.mrb[0].mxu0
        %548 = vmatprep.mubr.bf16.mxu0 0
        %549 = vmatmul.mubr.bf16.gmra.mrb[0].mxu0 %v390
        %v550 = vpop.f32.mrb[0].mxu0
        %v551 = vadd.f32 0.0, %v550
        %v552 = vpop.f32.mrb[0].mxu0
        %v553 = vpop.f32.mrb[0].mxu0
        %v554 = vadd.f32 0.0, %v553
        %v555 = vpop.f32.mrb[0].mxu0
        %556 = vmatprep.mubr.bf16.mxu0 0
        %557 = vmatmul.mubr.bf16.gmra.mrb[0].mxu0 %v391
        %v558 = vpop.f32.mrb[0].mxu0
        %v559 = vadd.f32 0.0, %v558
        %v560 = vpop.f32.mrb[0].mxu0
        %v561 = vpop.f32.mrb[0].mxu0
        %v562 = vadd.f32 0.0, %v561
        %v563 = vpop.f32.mrb[0].mxu0
        %564 = vmatprep.mubr.bf16.mxu0 0
        %565 = vmatmul.mubr.bf16.gmra.mrb[0].mxu0 %v392
        %v566 = vpop.f32.mrb[0].mxu0
        %v567 = vadd.f32 0.0, %v566
        %v568 = vpop.f32.mrb[0].mxu0
        %v569 = vpop.f32.mrb[0].mxu0
        %v570 = vadd.f32 0.0, %v569
        %v571 = vpop.f32.mrb[0].mxu0
        %572 = vmatprep.mubr.bf16.mxu0 0
        %573 = vmatmul.mubr.bf16.gmra.mrb[0].mxu0 %v393
        %v574 = vpop.f32.mrb[0].mxu0
        %v575 = vadd.f32 0.0, %v574
        %v576 = vpop.f32.mrb[0].mxu0
        %v577 = vpop.f32.mrb[0].mxu0
        %v578 = vadd.f32 0.0, %v577
        %v579 = vpop.f32.mrb[0].mxu0
        %580 = vmatprep.mubr.bf16.mxu0 0
        %581 = vmatmul.mubr.bf16.gmra.mrb[0].mxu0 %v394
        %v582 = vpop.f32.mrb[0].mxu0
        %v583 = vadd.f32 0.0, %v582
        %v584 = vpop.f32.mrb[0].mxu0
        %v585 = vpop.f32.mrb[0].mxu0
        %v586 = vadd.f32 0.0, %v585
        %v587 = vpop.f32.mrb[0].mxu0
        %588 = vmatprep.mubr.bf16.mxu0 0
        %589 = vmatmul.mubr.bf16.gmra.mrb[0].mxu0 %v395
        %v590 = vpop.f32.mrb[0].mxu0
        %v591 = vadd.f32 0.0, %v590
        %v592 = vpop.f32.mrb[0].mxu0
        %v593 = vpop.f32.mrb[0].mxu0
        %v594 = vadd.f32 0.0, %v593
        %v595 = vpop.f32.mrb[0].mxu0
        %596 = vmatprep.mubr.bf16.mxu0 0
        %597 = vmatmul.mubr.bf16.gmra.mrb[0].mxu0 %v396
        %v598 = vpop.f32.mrb[0].mxu0
        %v599 = vadd.f32 0.0, %v598
        %v600 = vpop.f32.mrb[0].mxu0
        %v601 = vpop.f32.mrb[0].mxu0
        %v602 = vadd.f32 0.0, %v601
        %v603 = vpop.f32.mrb[0].mxu0
        %604 = vmatprep.mubr.bf16.mxu0 0
        %605 = vmatmul.mubr.bf16.gmra.mrb[0].mxu0 %v397
        %v606 = vpop.f32.mrb[0].mxu0
        %v607 = vadd.f32 0.0, %v606
        %v608 = vpop.f32.mrb[0].mxu0
        %v609 = vpop.f32.mrb[0].mxu0
        %v610 = vadd.f32 0.0, %v609
        %v611 = vpop.f32.mrb[0].mxu0
        %612 = vmatprep.mubr.bf16.mxu0 0
        %613 = vmatmul.mubr.bf16.gmra.mrb[0].mxu0 %v398
        %v614 = vpop.f32.mrb[0].mxu0
        %v615 = vadd.f32 0.0, %v614
        %v616 = vpop.f32.mrb[0].mxu0
        %v617 = vpop.f32.mrb[0].mxu0
        %v618 = vadd.f32 0.0, %v617
        %v619 = vpop.f32.mrb[0].mxu0
        %620 = vmatprep.mubr.bf16.mxu0 0
        %621 = vmatmul.mubr.bf16.gmra.mrb[0].mxu0 %v399
        %v622 = vpop.f32.mrb[0].mxu0
        %v623 = vadd.f32 0.0, %v622
        %v624 = vpop.f32.mrb[0].mxu0
        %v625 = vpop.f32.mrb[0].mxu0
        %v626 = vadd.f32 0.0, %v625
        %v627 = vpop.f32.mrb[0].mxu0
        %628 = vmatprep.mubr.bf16.mxu0 0
        %629 = vmatmul.mubr.bf16.gmra.mrb[0].mxu0 %v400
        %v630 = vpop.f32.mrb[0].mxu0
        %v631 = vadd.f32 0.0, %v630
        %v632 = vpop.f32.mrb[0].mxu0
        %v633 = vpop.f32.mrb[0].mxu0
        %v634 = vadd.f32 0.0, %v633
        %v635 = vpop.f32.mrb[0].mxu0
        %636 = vmatprep.mubr.bf16.mxu0 0
        %637 = vmatmul.mubr.bf16.gmra.mrb[0].mxu0 %v401
        %v638 = vpop.f32.mrb[0].mxu0
        %v639 = vadd.f32 0.0, %v638
        %v640 = vpop.f32.mrb[0].mxu0
        %v641 = vpop.f32.mrb[0].mxu0
        %v642 = vadd.f32 0.0, %v641
        %v643 = vpop.f32.mrb[0].mxu0
        %644 = vmatprep.mubr.bf16.mxu0 0
        %645 = vmatmul.mubr.bf16.gmra.mrb[0].mxu0 %v402
        %v646 = vpop.f32.mrb[0].mxu0
        %v647 = vadd.f32 0.0, %v646
        %v648 = vpop.f32.mrb[0].mxu0
        %v649 = vpop.f32.mrb[0].mxu0
        %v650 = vadd.f32 0.0, %v649
        %v651 = vpop.f32.mrb[0].mxu0
        %652 = vmatprep.mubr.bf16.mxu0 0
        %653 = vmatmul.mubr.bf16.gmra.mrb[0].mxu0 %v403
        %v654 = vpop.f32.mrb[0].mxu0
        %v655 = vadd.f32 0.0, %v654
        %v656 = vpop.f32.mrb[0].mxu0
        %v657 = vpop.f32.mrb[0].mxu0
        %v658 = vadd.f32 0.0, %v657
        %v659 = vpop.f32.mrb[0].mxu0
        %660 = vmatprep.mubr.bf16.mxu0 0
        %661 = vmatmul.mubr.bf16.gmra.mrb[0].mxu0 %v404
        %v662 = vpop.f32.mrb[0].mxu0
        %v663 = vadd.f32 0.0, %v662
        %v664 = vpop.f32.mrb[0].mxu0
        %v665 = vpop.f32.mrb[0].mxu0
        %v666 = vadd.f32 0.0, %v665
        %v667 = vpop.f32.mrb[0].mxu0
        %668 = vmatprep.mubr.bf16.mxu0 0
        %669 = vmatmul.mubr.bf16.gmra.mrb[0].mxu0 %v405
        %v670 = vpop.f32.mrb[0].mxu0
        %v671 = vadd.f32 0.0, %v670
        %v672 = vpop.f32.mrb[0].mxu0
        %v673 = vpop.f32.mrb[0].mxu0
        %v674 = vadd.f32 0.0, %v673
        %v675 = vpop.f32.mrb[0].mxu0
        %676 = vmatprep.mubr.bf16.mxu0 0
        %677 = vmatmul.mubr.bf16.gmra.mrb[0].mxu0 %v406
        %v678 = vpop.f32.mrb[0].mxu0
        %v679 = vadd.f32 0.0, %v678
        %v680 = vpop.f32.mrb[0].mxu0
        %v681 = vpop.f32.mrb[0].mxu0
        %v682 = vadd.f32 0.0, %v681
        %v683 = vpop.f32.mrb[0].mxu0
        %684 = vmatprep.mubr.bf16.mxu0 0
        %685 = vmatmul.mubr.bf16.gmra.mrb[0].mxu0 %v407
        %v686 = vpop.f32.mrb[0].mxu0
        %v687 = vadd.f32 0.0, %v686
        %v688 = vpop.f32.mrb[0].mxu0
        %v689 = vpop.f32.mrb[0].mxu0
        %v690 = vadd.f32 0.0, %v689
        %v691 = vpop.f32.mrb[0].mxu0
        %692 = vmatprep.mubr.bf16.mxu0 0
        %693 = vmatmul.mubr.bf16.gmra.mrb[0].mxu0 %v408
        %v694 = vpop.f32.mrb[0].mxu0
        %v695 = vadd.f32 0.0, %v694
        %v696 = vpop.f32.mrb[0].mxu0
        %v697 = vpop.f32.mrb[0].mxu0
        %v698 = vadd.f32 0.0, %v697
        %v699 = vpop.f32.mrb[0].mxu0
        %700 = vmatprep.mubr.bf16.mxu0 0
        %701 = vmatmul.mubr.bf16.gmra.mrb[0].mxu0 %v409
        %v702 = vpop.f32.mrb[0].mxu0
        %v703 = vadd.f32 0.0, %v702
        %v704 = vpop.f32.mrb[0].mxu0
        %v705 = vpop.f32.mrb[0].mxu0
        %v706 = vadd.f32 0.0, %v705
        %v707 = vpop.f32.mrb[0].mxu0
        %708 = vmatprep.mubr.bf16.mxu0 0
        %709 = vmatmul.mubr.bf16.gmra.mrb[0].mxu0 %v410
        %v710 = vpop.f32.mrb[0].mxu0
        %v711 = vadd.f32 0.0, %v710
        %v712 = vpop.f32.mrb[0].mxu0
        %v713 = vpop.f32.mrb[0].mxu0
        %v714 = vadd.f32 0.0, %v713
        %v715 = vpop.f32.mrb[0].mxu0
        %716 = vmatprep.mubr.bf16.mxu0 0
        %717 = vmatmul.mubr.bf16.gmra.mrb[0].mxu0 %v411
        %v718 = vpop.f32.mrb[0].mxu0
        %v719 = vadd.f32 0.0, %v718
        %v720 = vpop.f32.mrb[0].mxu0
        %v721 = vpop.f32.mrb[0].mxu0
        %v722 = vadd.f32 0.0, %v721
        %v723 = vpop.f32.mrb[0].mxu0
        %724 = vmatprep.mubr.bf16.mxu0 0
        %725 = vmatmul.mubr.bf16.gmra.mrb[0].mxu0 %v412
        %v726 = vpop.f32.mrb[0].mxu0
        %v727 = vadd.f32 0.0, %v726
        %v728 = vpop.f32.mrb[0].mxu0
        %v729 = vpop.f32.mrb[0].mxu0
        %v730 = vadd.f32 0.0, %v729
        %v731 = vpop.f32.mrb[0].mxu0
        %732 = vmatprep.mubr.bf16.mxu0 0
        %733 = vmatmul.mubr.bf16.gmra.mrb[0].mxu0 %v413
        %v734 = vpop.f32.mrb[0].mxu0
        %v735 = vadd.f32 0.0, %v734
        %v736 = vpop.f32.mrb[0].mxu0
        %v737 = vpop.f32.mrb[0].mxu0
        %v738 = vadd.f32 0.0, %v737
        %v739 = vpop.f32.mrb[0].mxu0
        %740 = vmatprep.mubr.bf16.mxu0 0
        %741 = vmatmul.mubr.bf16.gmra.mrb[0].mxu0 %v414
        %v742 = vpop.f32.mrb[0].mxu0
        %v743 = vadd.f32 0.0, %v742
        %v744 = vpop.f32.mrb[0].mxu0
        %v745 = vpop.f32.mrb[0].mxu0
        %v746 = vadd.f32 0.0, %v745
        %v747 = vpop.f32.mrb[0].mxu0
        %748 = vmatprep.mubr.bf16.mxu0 0
        %749 = vmatmul.mubr.bf16.gmra.mrb[0].mxu0 %v415
        %v750 = vpop.f32.mrb[0].mxu0
        %v751 = vadd.f32 0.0, %v750
        %v752 = vpop.f32.mrb[0].mxu0
        %v753 = vpop.f32.mrb[0].mxu0
        %v754 = vadd.f32 0.0, %v753
        %v755 = vpop.f32.mrb[0].mxu0
        %756 = vmatprep.mubr.bf16.mxu0 0
        %757 = vmatmul.mubr.bf16.gmra.mrb[0].mxu0 %v416
        %v758 = vpop.f32.mrb[0].mxu0
        %v759 = vadd.f32 0.0, %v758
        %v760 = vpop.f32.mrb[0].mxu0
        %v761 = vpop.f32.mrb[0].mxu0
        %v762 = vadd.f32 0.0, %v761
        %v763 = vpop.f32.mrb[0].mxu0
        %764 = vmatprep.mubr.bf16.mxu0 0
        %765 = vmatmul.mubr.bf16.gmra.mrb[0].mxu0 %v417
        %v766 = vpop.f32.mrb[0].mxu0
        %v767 = vadd.f32 0.0, %v766
        %v768 = vpop.f32.mrb[0].mxu0
        %v769 = vpop.f32.mrb[0].mxu0
        %v770 = vadd.f32 0.0, %v769
        %v771 = vpop.f32.mrb[0].mxu0
        %772 = vmatprep.mubr.bf16.mxu0 0
        %773 = vmatmul.mubr.bf16.gmra.mrb[0].mxu0 %v418
        %v774 = vpop.f32.mrb[0].mxu0
        %v775 = vadd.f32 0.0, %v774
        %v776 = vpop.f32.mrb[0].mxu0
        %v777 = vpop.f32.mrb[0].mxu0
        %v778 = vadd.f32 0.0, %v777
        %v779 = vpop.f32.mrb[0].mxu0
        %780 = vmatprep.mubr.bf16.mxu0 0
        %781 = vmatmul.mubr.bf16.gmra.mrb[0].mxu0 %v419
        %v782 = vpop.f32.mrb[0].mxu0
        %v783 = vadd.f32 0.0, %v782
        %v784 = vpop.f32.mrb[0].mxu0
        %v785 = vpop.f32.mrb[0].mxu0
        %v786 = vadd.f32 0.0, %v785
        %v787 = vpop.f32.mrb[0].mxu0
        %788 = vdwg.mxu0
        %v789 = vpack.c.bf16 %v538, %v535
        %v790 = vpack.c.bf16 %v546, %v543
        %v791 = vpack.c.bf16 %v554, %v551
        %v792 = vpack.c.bf16 %v562, %v559
        %v793 = vpack.c.bf16 %v570, %v567
        %v794 = vpack.c.bf16 %v578, %v575
        %v795 = vpack.c.bf16 %v586, %v583
        %v796 = vpack.c.bf16 %v594, %v591
        %v797 = vpack.c.bf16 %v602, %v599
        %v798 = vpack.c.bf16 %v610, %v607
        %v799 = vpack.c.bf16 %v618, %v615
        %v800 = vpack.c.bf16 %v626, %v623
        %v801 = vpack.c.bf16 %v634, %v631
        %v802 = vpack.c.bf16 %v642, %v639
        %v803 = vpack.c.bf16 %v650, %v647
        %v804 = vpack.c.bf16 %v658, %v655
        %v805 = vpack.c.bf16 %v666, %v663
        %v806 = vpack.c.bf16 %v674, %v671
        %v807 = vpack.c.bf16 %v682, %v679
        %v808 = vpack.c.bf16 %v690, %v687
        %v809 = vpack.c.bf16 %v698, %v695
        %v810 = vpack.c.bf16 %v706, %v703
        %v811 = vpack.c.bf16 %v714, %v711
        %v812 = vpack.c.bf16 %v722, %v719
        %v813 = vpack.c.bf16 %v730, %v727
        %v814 = vpack.c.bf16 %v738, %v735
        %v815 = vpack.c.bf16 %v746, %v743
        %v816 = vpack.c.bf16 %v754, %v751
        %v817 = vpack.c.bf16 %v762, %v759
        %v818 = vpack.c.bf16 %v770, %v767
        %v819 = vpack.c.bf16 %v778, %v775
        %v820 = vpack.c.bf16 %v786, %v783
        %v853 = vunpack.c.l.b16 %v789
        %v854 = vunpack.c.h.b16 %v789
        %v855 = vunpack.c.l.b16 %v790
        %v856 = vunpack.c.h.b16 %v790
        %v857 = vunpack.c.l.b16 %v791
        %v858 = vunpack.c.h.b16 %v791
        %v859 = vunpack.c.l.b16 %v792
        %v860 = vunpack.c.h.b16 %v792
        %v861 = vunpack.c.l.b16 %v793
        %v862 = vunpack.c.h.b16 %v793
        %v863 = vunpack.c.l.b16 %v794
        %v864 = vunpack.c.h.b16 %v794
        %v865 = vunpack.c.l.b16 %v795
        %v866 = vunpack.c.h.b16 %v795
        %v867 = vunpack.c.l.b16 %v796
        %v868 = vunpack.c.h.b16 %v796
        %v869 = vunpack.c.l.b16 %v797
        %v870 = vunpack.c.h.b16 %v797
        %v871 = vunpack.c.l.b16 %v798
        %v872 = vunpack.c.h.b16 %v798
        %v873 = vunpack.c.l.b16 %v799
        %v874 = vunpack.c.h.b16 %v799
        %v875 = vunpack.c.l.b16 %v800
        %v876 = vunpack.c.h.b16 %v800
        %v877 = vunpack.c.l.b16 %v801
        %v878 = vunpack.c.h.b16 %v801
        %v879 = vunpack.c.l.b16 %v802
        %v880 = vunpack.c.h.b16 %v802
        %v881 = vunpack.c.l.b16 %v803
        %v882 = vunpack.c.h.b16 %v803
        %v883 = vunpack.c.l.b16 %v804
        %v884 = vunpack.c.h.b16 %v804
        %v885 = vunpack.c.l.b16 %v805
        %v886 = vunpack.c.h.b16 %v805
        %v887 = vunpack.c.l.b16 %v806
        %v888 = vunpack.c.h.b16 %v806
        %v889 = vunpack.c.l.b16 %v807
        %v890 = vunpack.c.h.b16 %v807
        %v891 = vunpack.c.l.b16 %v808
        %v892 = vunpack.c.h.b16 %v808
        %v893 = vunpack.c.l.b16 %v809
        %v894 = vunpack.c.h.b16 %v809
        %v895 = vunpack.c.l.b16 %v810
        %v896 = vunpack.c.h.b16 %v810
        %v897 = vunpack.c.l.b16 %v811
        %v898 = vunpack.c.h.b16 %v811
        %v899 = vunpack.c.l.b16 %v812
        %v900 = vunpack.c.h.b16 %v812
        %v901 = vunpack.c.l.b16 %v813
        %v902 = vunpack.c.h.b16 %v813
        %v903 = vunpack.c.l.b16 %v814
        %v904 = vunpack.c.h.b16 %v814
        %v905 = vunpack.c.l.b16 %v815
        %v906 = vunpack.c.h.b16 %v815
        %v907 = vunpack.c.l.b16 %v816
        %v908 = vunpack.c.h.b16 %v816
        %v909 = vunpack.c.l.b16 %v817
        %v910 = vunpack.c.h.b16 %v817
        %v911 = vunpack.c.l.b16 %v818
        %v912 = vunpack.c.h.b16 %v818
        %v913 = vunpack.c.l.b16 %v819
        %v914 = vunpack.c.h.b16 %v819
        %v915 = vunpack.c.l.b16 %v820
        %v916 = vunpack.c.h.b16 %v820
        %v917 = vpack.c.b16 %v853, %v853
        %v918 = vpack.c.b16 %v854, %v854
        %v919 = vpack.c.b16 %v855, %v855
        %v920 = vpack.c.b16 %v856, %v856
        %v921 = vpack.c.b16 %v857, %v857
        %v922 = vpack.c.b16 %v858, %v858
        %v923 = vpack.c.b16 %v859, %v859
        %v924 = vpack.c.b16 %v860, %v860
        %v925 = vpack.c.b16 %v861, %v861
        %v926 = vpack.c.b16 %v862, %v862
        %v927 = vpack.c.b16 %v863, %v863
        %v928 = vpack.c.b16 %v864, %v864
        %v929 = vpack.c.b16 %v865, %v865
        %v930 = vpack.c.b16 %v866, %v866
        %v931 = vpack.c.b16 %v867, %v867
        %v932 = vpack.c.b16 %v868, %v868
        %v933 = vpack.c.b16 %v869, %v869
        %v934 = vpack.c.b16 %v870, %v870
        %v935 = vpack.c.b16 %v871, %v871
        %v936 = vpack.c.b16 %v872, %v872
        %v937 = vpack.c.b16 %v873, %v873
        %v938 = vpack.c.b16 %v874, %v874
        %v939 = vpack.c.b16 %v875, %v875
        %v940 = vpack.c.b16 %v876, %v876
        %v941 = vpack.c.b16 %v877, %v877
        %v942 = vpack.c.b16 %v878, %v878
        %v943 = vpack.c.b16 %v879, %v879
        %v944 = vpack.c.b16 %v880, %v880
        %v945 = vpack.c.b16 %v881, %v881
        %v946 = vpack.c.b16 %v882, %v882
        %v947 = vpack.c.b16 %v883, %v883
        %v948 = vpack.c.b16 %v884, %v884
        %v949 = vpack.c.b16 %v885, %v885
        %v950 = vpack.c.b16 %v886, %v886
        %v951 = vpack.c.b16 %v887, %v887
        %v952 = vpack.c.b16 %v888, %v888
        %v953 = vpack.c.b16 %v889, %v889
        %v954 = vpack.c.b16 %v890, %v890
        %v955 = vpack.c.b16 %v891, %v891
        %v956 = vpack.c.b16 %v892, %v892
        %v957 = vpack.c.b16 %v893, %v893
        %v958 = vpack.c.b16 %v894, %v894
        %v959 = vpack.c.b16 %v895, %v895
        %v960 = vpack.c.b16 %v896, %v896
        %v961 = vpack.c.b16 %v897, %v897
        %v962 = vpack.c.b16 %v898, %v898
        %v963 = vpack.c.b16 %v899, %v899
        %v964 = vpack.c.b16 %v900, %v900
        %v965 = vpack.c.b16 %v901, %v901
        %v966 = vpack.c.b16 %v902, %v902
        %v967 = vpack.c.b16 %v903, %v903
        %v968 = vpack.c.b16 %v904, %v904
        %v969 = vpack.c.b16 %v905, %v905
        %v970 = vpack.c.b16 %v906, %v906
        %v971 = vpack.c.b16 %v907, %v907
        %v972 = vpack.c.b16 %v908, %v908
        %v973 = vpack.c.b16 %v909, %v909
        %v974 = vpack.c.b16 %v910, %v910
        %v975 = vpack.c.b16 %v911, %v911
        %v976 = vpack.c.b16 %v912, %v912
        %v977 = vpack.c.b16 %v913, %v913
        %v978 = vpack.c.b16 %v914, %v914
        %v979 = vpack.c.b16 %v915, %v915
        %v980 = vpack.c.b16 %v916, %v916
        %1045 = vst [vmem:[%s176] sm:$0xf] %v917
        %1046 = vst [vmem:[%s176 + $0x4] sm:$0xf] %v918
        %1047 = vst [vmem:[%s176 + $0x8] sm:$0xf] %v919
        %1048 = vst [vmem:[%s176 + $0xc] sm:$0xf] %v920
        %1049 = vst [vmem:[%s176 + $0x10] sm:$0xf] %v921
        %1050 = vst [vmem:[%s176 + $0x14] sm:$0xf] %v922
        %1051 = vst [vmem:[%s176 + $0x18] sm:$0xf] %v923
        %1052 = vst [vmem:[%s176 + $0x1c] sm:$0xf] %v924
        %1053 = vst [vmem:[%s176 + $0x20] sm:$0xf] %v925
        %1054 = vst [vmem:[%s176 + $0x24] sm:$0xf] %v926
        %1055 = vst [vmem:[%s176 + $0x28] sm:$0xf] %v927
        %1056 = vst [vmem:[%s176 + $0x2c] sm:$0xf] %v928
        %1057 = vst [vmem:[%s176 + $0x30] sm:$0xf] %v929
        %1058 = vst [vmem:[%s176 + $0x34] sm:$0xf] %v930
        %1059 = vst [vmem:[%s176 + $0x38] sm:$0xf] %v931
        %1060 = vst [vmem:[%s176 + $0x3c] sm:$0xf] %v932
        %1061 = vst [vmem:[%s176 + $0x40] sm:$0xf] %v933
        %1062 = vst [vmem:[%s176 + $0x44] sm:$0xf] %v934
        %1063 = vst [vmem:[%s176 + $0x48] sm:$0xf] %v935
        %1064 = vst [vmem:[%s176 + $0x4c] sm:$0xf] %v936
        %1065 = vst [vmem:[%s176 + $0x50] sm:$0xf] %v937
        %1066 = vst [vmem:[%s176 + $0x54] sm:$0xf] %v938
        %1067 = vst [vmem:[%s176 + $0x58] sm:$0xf] %v939
        %1068 = vst [vmem:[%s176 + $0x5c] sm:$0xf] %v940
        %1069 = vst [vmem:[%s176 + $0x60] sm:$0xf] %v941
        %1070 = vst [vmem:[%s176 + $0x64] sm:$0xf] %v942
        %1071 = vst [vmem:[%s176 + $0x68] sm:$0xf] %v943
        %1072 = vst [vmem:[%s176 + $0x6c] sm:$0xf] %v944
        %1073 = vst [vmem:[%s176 + $0x70] sm:$0xf] %v945
        %1074 = vst [vmem:[%s176 + $0x74] sm:$0xf] %v946
        %1075 = vst [vmem:[%s176 + $0x78] sm:$0xf] %v947
        %1076 = vst [vmem:[%s176 + $0x7c] sm:$0xf] %v948
        %1077 = vst [vmem:[%s176 + $0x80] sm:$0xf] %v949
        %1078 = vst [vmem:[%s176 + $0x84] sm:$0xf] %v950
        %1079 = vst [vmem:[%s176 + $0x88] sm:$0xf] %v951
        %1080 = vst [vmem:[%s176 + $0x8c] sm:$0xf] %v952
        %1081 = vst [vmem:[%s176 + $0x90] sm:$0xf] %v953
        %1082 = vst [vmem:[%s176 + $0x94] sm:$0xf] %v954
        %1083 = vst [vmem:[%s176 + $0x98] sm:$0xf] %v955
        %1084 = vst [vmem:[%s176 + $0x9c] sm:$0xf] %v956
        %1085 = vst [vmem:[%s176 + $0xa0] sm:$0xf] %v957
        %1086 = vst [vmem:[%s176 + $0xa4] sm:$0xf] %v958
        %1087 = vst [vmem:[%s176 + $0xa8] sm:$0xf] %v959
        %1088 = vst [vmem:[%s176 + $0xac] sm:$0xf] %v960
        %1089 = vst [vmem:[%s176 + $0xb0] sm:$0xf] %v961
        %1090 = vst [vmem:[%s176 + $0xb4] sm:$0xf] %v962
        %1091 = vst [vmem:[%s176 + $0xb8] sm:$0xf] %v963
        %1092 = vst [vmem:[%s176 + $0xbc] sm:$0xf] %v964
        %1093 = vst [vmem:[%s176 + $0xc0] sm:$0xf] %v965
        %1094 = vst [vmem:[%s176 + $0xc4] sm:$0xf] %v966
        %1095 = vst [vmem:[%s176 + $0xc8] sm:$0xf] %v967
        %1096 = vst [vmem:[%s176 + $0xcc] sm:$0xf] %v968
        %1097 = vst [vmem:[%s176 + $0xd0] sm:$0xf] %v969
        %1098 = vst [vmem:[%s176 + $0xd4] sm:$0xf] %v970
        %1099 = vst [vmem:[%s176 + $0xd8] sm:$0xf] %v971
        %1100 = vst [vmem:[%s176 + $0xdc] sm:$0xf] %v972
        %1101 = vst [vmem:[%s176 + $0xe0] sm:$0xf] %v973
        %1102 = vst [vmem:[%s176 + $0xe4] sm:$0xf] %v974
        %1103 = vst [vmem:[%s176 + $0xe8] sm:$0xf] %v975
        %1104 = vst [vmem:[%s176 + $0xec] sm:$0xf] %v976
        %1105 = vst [vmem:[%s176 + $0xf0] sm:$0xf] %v977
        %1106 = vst [vmem:[%s176 + $0xf4] sm:$0xf] %v978
        %1107 = vst [vmem:[%s176 + $0xf8] sm:$0xf] %v979
        %1108 = vst [vmem:[%s176 + $0xfc] sm:$0xf] %v980
        %s1109 = sand.u32 %s75, 1
        %s1110 = scalar_lea.sflag [#allocation4], %s1109
        %s1111 = sand.u32 %s75, 1
        %s1112 = smul.addr %s1111, 256
        %s1113 = scalar_lea.vmem [#allocation7], %s1112
        // Predicated region
        $region37: #{tpu_custom_call.1} parent=27 // pred_check
          %p1114 = pneg %p85
        $region38: #{tpu_custom_call.1} parent=27 // pred_check_branch
          %1116 = sbr.rel (%p1114) target = $region40
        $region39: #{tpu_custom_call.1} parent=27 // pred_region
          %s1117 = smul.u32 64, %s20
          %s1119 = ssub.s32 4096, 4096
          %1120 = vsyncadd %s1110, %s1119
          %s1121 = smul.addr %s1117, 64
          %s1122 = scalar_lea.hbm %s2, %s1121
          %s1123 = sshll.u32 %s1113, 4
          %s1124 = int_to_ptr.vmem [resolvable:$true] %s1123
          %1129 = dma.vmem_to_hbm [thread:$0]  %s1124, 4096, %s1122, %s1110, 64, 64, 4
        $region40: #{tpu_custom_call.1} parent=27 // pred_fallthru
          _
      $region28: #{tpu_custom_call.1} parent=5 // pred_fallthru
        _
      %p1130 = scmp.le.s32.totalorder 2, %s15
      // Predicated region
      $region41: #{tpu_custom_call.1} parent=5 // pred_check
        %p1131 = pneg %p1130
      $region42: #{tpu_custom_call.1} parent=5 // pred_check_branch
        %1133 = sbr.rel (%p1131) target = $region44
      $region43: #{tpu_custom_call.1} parent=5 // pred_region
        %s1134 = ssub.s32 %s15, 2
        // Predicated region
        $region45: #{tpu_custom_call.1} parent=43 // pred_check
          %p1135 = pneg %p91
        $region46: #{tpu_custom_call.1} parent=43 // pred_check_branch
          %1137 = sbr.rel (%p1135) target = $region48
        $region47: #{tpu_custom_call.1} parent=43 // pred_region
          %s1138 = sand.u32 %s76, 1
          %s1139 = scalar_lea.sflag [#allocation4], %s1138
          %s1140 = sand.u32 %s76, 1
          %s1141 = smul.addr %s1140, 256
          %s1142 = scalar_lea.vmem [#allocation7], %s1141
          %1143 = dma.done %s1139, 4096
        $region48: #{tpu_custom_call.1} parent=43 // pred_fallthru
          _
      $region44: #{tpu_custom_call.1} parent=5 // pred_fallthru
        _
    $region6: #{tpu_custom_call.1} parent=1 // loop_footer
      %s19 = sadd.s32 1, %s15
    $region7: #{tpu_custom_call.1} parent=1 // loop_footer_branch
      %14 = sbr.rel target = $region3
    $region8: #{tpu_custom_call.1} parent=1 // loop_exit
      _
    %1144 = vsyncpa [#allocation3], 1
    %s1145 = scalar_lea.sflag [#allocation3], 1
    %1146 = vsyncpa %s1145, 1
    %1147 = vsyncpa [#allocation6], 1
    %1148 = vsyncpa [#allocation4], 1
    %s1149 = scalar_lea.sflag [#allocation4], 1
    %1150 = vsyncpa %s1149, 1

</llo_original>
